<compile_context>
chip_gen: v7x
topology: tpu7x:2x2x1
jax: 0.10.0
libtpu: 0.0.40
codegen_flags: <defaults>
</compile_context>

<pallas_src>
import jax
import jax.numpy as jnp
from jax.experimental import pallas as pl
from jax.experimental.pallas import tpu as pltpu


def _cdiv(a, b):
    return -(-a // b)


def _round_up(a, b):
    return _cdiv(a, b) * b


def _weighted_sum_kernel(keep_ref, w_ref, x_ref, o_ref, acc_ref):
    # keep_ref : SMEM int32[n_keep]  -- consumed only by the input index_map
    # w_ref    : SMEM f32[n_keep]    -- compacted nonzero filter weights
    # x_ref    : VMEM (1, TR, 128)   -- current kept frame's row tile
    # o_ref    : VMEM (TR, 128)      -- output tile, resident across the frame axis
    # acc_ref  : VMEM (TR, 128) f32  -- accumulator scratch
    del keep_ref  # only used for data-dependent tiling in the index_map
    g = pl.program_id(1)

    @pl.when(g == 0)
    def _():
        acc_ref[...] = jnp.zeros_like(acc_ref)

    acc_ref[...] += w_ref[g] * x_ref[0].astype(jnp.float32)

    @pl.when(g == pl.num_programs(1) - 1)
    def _():
        o_ref[...] = acc_ref[...].astype(o_ref.dtype)


def _choose_tile_rows(rows, sublane, in_bytes, out_bytes,
                      vmem_budget_bytes=24 << 20,
                      target_block_bytes=2 << 20,
                      min_tile_rows=512):
    """Row-tile size for the (row_blocks, kept_frames) grid.

    VMEM per tile row: double-buffered (1, tr, 128) input block, double-buffered
    (tr, 128) output block, plus the f32 accumulator scratch.  The per-step DMA
    payload is kept around ~2 MiB so the ~0.35 us/step grid overhead stays
    amortized even at v7x's ~3.2 TB/s, and the footprint stays far inside the
    32 MiB scoped VMEM budget on v7x (64 MiB physical).
    """
    per_row = 128 * (2 * in_bytes + 2 * out_bytes + 4)
    vmem_cap = max(sublane, (vmem_budget_bytes // per_row) // sublane * sublane)
    payload_cap = max(sublane,
                      (target_block_bytes // (128 * in_bytes)) // sublane * sublane)
    cap = min(vmem_cap, payload_cap)
    min_tr = max(sublane, min(cap, min_tile_rows))
    if rows <= min_tr:
        return _round_up(rows, sublane)          # single (possibly ragged) block
    # Prefer an even number of row blocks >= 4 (>= 2 per v7x TensorCore, evenly
    # balanced) while keeping tr in [min_tr, cap].
    tr = max(min_tr, min(cap, _round_up(_cdiv(rows, 4), sublane)))
    nb = _cdiv(rows, tr)
    if nb > 1 and nb % 2:
        tr_even = _round_up(_cdiv(rows, nb + 1), sublane)
        if tr_even >= min_tr:
            tr = tr_even
    return tr


def indexed_image_filter(index, images):
    """IndexedImageFilter.forward: pure indexing, no kernel needed."""
    if index >= images.shape[0]:
        return None
    return images[index]


def weighted_image_filter(filter_weights, images):
    """Pallas TPU implementation of WeightedImageFilter.forward.

    filter_weights: static Python sequence of scalars (module attribute).
    images:         [N, B, C, H, W] frame history stacked on axis 0.
    Returns [B, C, H, W], or None if no weight is nonzero (PyTorch semantics).
    """
    # zip() semantics: truncate to the shorter of weights / frame history.
    weights = [float(wt) for wt in filter_weights][: images.shape[0]]
    keep = [i for i, wt in enumerate(weights) if wt != 0.0]
    if not keep:
        # PyTorch returns None when every weight is zero (or the list is empty).
        return None
    kept_weights = [weights[i] for i in keep]
    n_keep = len(keep)

    n_total, b, c, h, w = images.shape
    in_dtype = images.dtype
    if jnp.issubdtype(in_dtype, jnp.floating):
        out_dtype = in_dtype
    else:
        # PyTorch promotes float weight * integer tensor to a float result.
        out_dtype = jnp.float32
    in_bytes = jnp.dtype(in_dtype).itemsize
    out_bytes = jnp.dtype(out_dtype).itemsize
    sublane = max(8, 32 // in_bytes)  # 8 for f32, 16 for bf16, 32 for int8

    total = b * c * h * w
    rows = _cdiv(total, 128)
    lane_pad = rows * 128 - total

    # Lane-dense slab.  The reshape is a free bitcast when total is 128-aligned
    # (the common case for image tensors); zero-weight frames stay in the slab
    # but are never DMA'd because the index_map only visits kept frame indices.
    x = images.reshape(n_total, total)
    if lane_pad:
        # Rare fallback: frame size not 128-aligned.  This copies the slab once.
        x = jnp.pad(x, ((0, 0), (0, lane_pad)))
    x = x.reshape(n_total, rows, 128)

    tr = _choose_tile_rows(rows, sublane, in_bytes, out_bytes)
    n_blocks = _cdiv(rows, tr)  # ragged last block is masked by Pallas

    keep_arr = jnp.asarray(keep, dtype=jnp.int32)
    w_arr = jnp.asarray(kept_weights, dtype=jnp.float32)

    # Explicit VMEM limit: double-buffered in/out blocks + f32 scratch + headroom,
    # clamped to the 32 MiB scoped budget (safe on v7x's 64 MiB physical VMEM).
    block_bytes = (2 * tr * 128 * in_bytes
                   + 2 * tr * 128 * out_bytes
                   + tr * 128 * 4)
    vmem_limit = min(block_bytes + (4 << 20), 32 << 20)

    grid_spec = pltpu.PrefetchScalarGridSpec(
        num_scalar_prefetch=2,
        grid=(n_blocks, n_keep),
        in_specs=[
            # Data-dependent frame selection: only kept frames are ever read.
            pl.BlockSpec((1, tr, 128), lambda i, g, keep, wts: (keep[g], i, 0)),
        ],
        # Output block index constant across the (innermost, "arbitrary") frame
        # axis -> resident accumulator, one HBM write per row tile.
        out_specs=pl.BlockSpec((tr, 128), lambda i, g, keep, wts: (i, 0)),
        scratch_shapes=[pltpu.VMEM((tr, 128), jnp.float32)],
    )

    out = pl.pallas_call(
        _weighted_sum_kernel,
        out_shape=jax.ShapeDtypeStruct((rows, 128), out_dtype),
        grid_spec=grid_spec,
        compiler_params=pltpu.CompilerParams(
            dimension_semantics=("parallel", "arbitrary"),
            vmem_limit_bytes=vmem_limit,
        ),
    )(keep_arr, w_arr, x)

    out = out.reshape(rows * 128)
    if lane_pad:
        out = out[:total]
    return out.reshape(b, c, h, w)


# TODO(synk): the remaining FrameChannelStatisticsEvaluator stages (color
# transform, steerable-pyramid builder, channel/cross-color statistics, pooling)
# depend on external modules not given in the spec and are not translated here.


def _reference_weighted_filter(filter_weights, images):
    """Pure-JAX mirror of WeightedImageFilter.forward (skip-zero semantics)."""
    ref = None
    for wt, img in zip(filter_weights, images):
        if wt == 0:
            continue
        ref = wt * img if ref is None else wt * img + ref
    return ref


if __name__ == "__main__":
    key = jax.random.PRNGKey(0)
    k1, k2 = jax.random.split(key)

    # --- Test 1: small NCHW frames, one zero weight (skip semantics) ----------
    filter_weights = [0.5, 0.0, 0.25, 0.125, 0.125]
    n = len(filter_weights)
    b, c, h, w = 2, 4, 16, 16
    images = jax.random.normal(k1, (n, b, c, h, w), dtype=jnp.float32)
    # Poison the zero-weight frame: PyTorch never reads it, and neither do we.
    images = images.at[1].set(jnp.nan)

    result = weighted_image_filter(filter_weights, images)
    result = jax.block_until_ready(result)
    ref = _reference_weighted_filter(filter_weights, images)
    assert result.shape == (b, c, h, w)
    assert bool(jnp.isfinite(result).all())
    assert jnp.allclose(result, ref, atol=1e-5, rtol=1e-5)

    # --- Test 2: multi-block grid with a ragged (masked) last row tile --------
    fw2 = [0.75, -0.5, 0.3125]
    imgs2 = jax.random.normal(k2, (3, 1, 1, 530, 128), dtype=jnp.float32)
    res2 = jax.block_until_ready(weighted_image_filter(fw2, imgs2))
    ref2 = _reference_weighted_filter(fw2, imgs2)
    assert res2.shape == (1, 1, 530, 128)
    assert jnp.allclose(res2, ref2, atol=1e-5, rtol=1e-5)

    # --- Test 3: all-zero weights -> None, matching PyTorch -------------------
    assert weighted_image_filter([0.0, 0.0, 0.0], images[:3]) is None

    print("KERNEL_OK")
</pallas_src>

<mosaic_0001>
module attributes {stable_mosaic.version = 11 : i64} {
  func.func @_weighted_sum_kernel(%arg0: i32, %arg1: i32, %arg2: memref<4xi32, #tpu.memory_space<smem>>, %arg3: memref<4xf32, #tpu.memory_space<smem>>, %arg4: memref<1x16x128xf32, #tpu.memory_space<vmem>>, %arg5: memref<16x128xf32, #tpu.memory_space<vmem>>, %arg6: memref<16x128xf32, #tpu.memory_space<vmem>>) attributes {dimension_semantics = [#tpu.dimension_semantics<parallel>, #tpu.dimension_semantics<arbitrary>], iteration_bounds = array<i64: 1, 4>, scalar_prefetch = 2 : i64, scratch_operands = 1 : i64, tpu.core_type = #tpu.core_type<tc>, window_params = [{transform_indices = @transform_0, window_bounds = array<i64: 1, 16, 128>}, {transform_indices = @transform_1, window_bounds = array<i64: 16, 128>}]} {
    %c0_i32 = arith.constant 0 : i32
    %0 = arith.cmpi eq, %arg1, %c0_i32 : i32
    %1 = arith.extui %0 : i1 to i32
    %c0_i32_0 = arith.constant 0 : i32
    %2 = arith.cmpi ne, %1, %c0_i32_0 : i32
    scf.if %2 {
      %cst = arith.constant 0.000000e+00 : f32
      %15 = vector.broadcast %cst : f32 to vector<16x128xf32>
      %c0_8 = arith.constant 0 : index
      %c0_9 = arith.constant 0 : index
      %16 = vector.load %arg6[%c0_8, %c0_9] : memref<16x128xf32, #tpu.memory_space<vmem>>, vector<16x128xf32>
      tpu.vector_store %arg6[%c0_8, %c0_9], %15 {strides = array<i32>} : memref<16x128xf32, #tpu.memory_space<vmem>>, vector<16x128xf32>,
    } else {
    }
    %c0 = arith.constant 0 : index
    %c0_1 = arith.constant 0 : index
    %3 = vector.load %arg6[%c0, %c0_1] : memref<16x128xf32, #tpu.memory_space<vmem>>, vector<16x128xf32>
    %4 = arith.index_cast %arg1 : i32 to index
    %5 = memref.load %arg3[%4] : memref<4xf32, #tpu.memory_space<smem>>
    %c0_2 = arith.constant 0 : index
    %c0_3 = arith.constant 0 : index
    %c0_4 = arith.constant 0 : index
    %6 = vector.load %arg4[%c0_2, %c0_3, %c0_4] : memref<1x16x128xf32, #tpu.memory_space<vmem>>, vector<1x16x128xf32>
    %7 = vector.shape_cast %6 : vector<1x16x128xf32> to vector<16x128xf32>
    %8 = vector.broadcast %5 : f32 to vector<16x128xf32>
    %9 = arith.mulf %8, %7 : vector<16x128xf32>
    %10 = arith.addf %3, %9 : vector<16x128xf32>
    %c0_5 = arith.constant 0 : index
    %c0_6 = arith.constant 0 : index
    %11 = vector.load %arg6[%c0_5, %c0_6] : memref<16x128xf32, #tpu.memory_space<vmem>>, vector<16x128xf32>
    tpu.vector_store %arg6[%c0_5, %c0_6], %10 {strides = array<i32>} : memref<16x128xf32, #tpu.memory_space<vmem>>, vector<16x128xf32>,
    %c3_i32 = arith.constant 3 : i32
    %12 = arith.cmpi eq, %arg1, %c3_i32 : i32
    %13 = arith.extui %12 : i1 to i32
    %c0_i32_7 = arith.constant 0 : i32
    %14 = arith.cmpi ne, %13, %c0_i32_7 : i32
    scf.if %14 {
      %c0_8 = arith.constant 0 : index
      %c0_9 = arith.constant 0 : index
      %15 = vector.load %arg6[%c0_8, %c0_9] : memref<16x128xf32, #tpu.memory_space<vmem>>, vector<16x128xf32>
      %c0_10 = arith.constant 0 : index
      %c0_11 = arith.constant 0 : index
      %16 = vector.load %arg5[%c0_10, %c0_11] : memref<16x128xf32, #tpu.memory_space<vmem>>, vector<16x128xf32>
      tpu.vector_store %arg5[%c0_10, %c0_11], %15 {strides = array<i32>} : memref<16x128xf32, #tpu.memory_space<vmem>>, vector<16x128xf32>,
    } else {
    }
    return
  }
  func.func @transform_0(%arg0: i32, %arg1: i32, %arg2: memref<4xi32, #tpu.memory_space<smem>>, %arg3: memref<4xf32, #tpu.memory_space<smem>>) -> (i32, i32, i32) {
    %0 = arith.index_cast %arg1 : i32 to index
    %1 = memref.load %arg2[%0] : memref<4xi32, #tpu.memory_space<smem>>
    %c0_i32 = arith.constant 0 : i32
    %c0_i32_0 = arith.constant 0 : i32
    return %1, %arg0, %c0_i32 : i32, i32, i32
  }
  func.func @transform_1(%arg0: i32, %arg1: i32, %arg2: memref<4xi32, #tpu.memory_space<smem>>, %arg3: memref<4xf32, #tpu.memory_space<smem>>) -> (i32, i32) {
    %c0_i32 = arith.constant 0 : i32
    %c0_i32_0 = arith.constant 0 : i32
    return %arg0, %c0_i32 : i32, i32
  }
}

</mosaic_0001>

<llo_original>
// kernel: tpu_custom_call.1
$region0: #{tpu_custom_call.1}
  #allocation0 [shape = 'u32[]', space=smem, size = 0x4, offset = 0x4, fixed_abs, tag = 'smem constant byte address 0x4 - core index']
  #allocation1 [shape = 'u32[144,128]{1,0:T(1,128)}', space=vmem, size = 0x12000, scoped, tag = 'internal scratch']
  #allocation2 [shape = 'f32[16,128]{1,0:T(8,128)}', space=vmem, size = 0x2000, scoped, tag = 'scratch operand']
  #allocation3 [shape = 's32[1]{0}', space=sflag, size = 0x4, scoped, tag = 'scoped memory for tpu_custom_call.1']
  #allocation4 [shape = 'u8[512]{0}', space=smem, size = 0x200, scoped, tag = 'prefetched SMEM operand 0']
  #allocation5 [shape = 'u8[512]{0}', space=smem, size = 0x200, scoped, tag = 'prefetched SMEM operand 1']
  %s0 = inlined_call_operand.hbm [shape: s32[4], index: 0, kind: input, shape index: {}]
  %s1 = inlined_call_operand.vmem [shape: f32[4], index: 1, kind: input, shape index: {}]
  %s2 = inlined_call_operand.hbm [shape: f32[5,16,128], index: 2, kind: input, shape index: {}]
  %s3 = inlined_call_operand.hbm [shape: f32[16,128], index: 3, kind: output, shape index: {}]
  %s4 = sld [smem:[#allocation0]]
  $region49: #{tpu_custom_call.1} parent=0
    _
  %s6 = ssub.s32 1, %s4
  %s7 = scalar_select 0, %s6, %s4
  %9 = dma.hbm_to_smem %s0, 16, [#allocation4], [#allocation3]
  %s10 = sshll.u32 %s1, 4
  %s11 = int_to_ptr.vmem [resolvable:$true] %s10
  %13 = dma.vmem_to_smem %s11, 16, [#allocation5], [#allocation3]
  %14 = dma.done [#allocation3], 32
  %15 = sfence
  $region1: #{tpu_custom_call.1} parent=0
    #allocation6 [shape = 'u8[16384]{0}', space=vmem, size = 0x4000, scoped, tag = 'input window, operand 2']
    #allocation7 [shape = 's32[2]{0}', space=sflag, size = 0x8, scoped, tag = 'scoped memory for tpu_custom_call.1']
    #allocation8 [shape = 's32[2]{0}', space=sflag, size = 0x8, scoped, tag = 'scoped memory for tpu_custom_call.1']
    #allocation9 [shape = 'u8[8192]{0}', space=vmem, size = 0x2000, scoped, tag = 'output window, operand 0, single buffered']
    %16 = vsyncpa [#allocation7], 0
    %s17 = scalar_lea.sflag [#allocation7], 1
    %18 = vsyncpa %s17, 0
    %19 = vsyncpa [#allocation8], 0
    loop: start=0, step=1, limit=6
    $region2: #{tpu_custom_call.1} parent=1 // loop_pre_header
      _
    $region3: #{tpu_custom_call.1} parent=1 // loop_header
      %s21 = sphi 0, %s25
      %p22 = scmp.ge.s32.totalorder %s21, 6
      %s28 = sphi 0, %s40
      %s29 = sphi 0, %s36
      %s30 = sphi 0, %s28
      %s31 = sphi 0, %s29
      %s32 = sphi 0, %s30
      %s33 = sphi 0, %s31
      %s47 = sphi 0, %s49
      %s50 = sphi 0, %s47
      %s51 = sphi 0, %s50
      %s67 = sphi 0, %s51
      %s73 = sphi 0, %s75
      %s76 = sphi 0, %s73
      %s77 = sphi 0, %s76
      %s93 = sphi 0, %s77
    $region4: #{tpu_custom_call.1} parent=1 // loop_header_branch
      %24 = sbr.rel (%p22) target = $region8
    $region5: #{tpu_custom_call.1} parent=1 // loop_body
      %s26 = ssub.s32 %s21, 1
      %s27 = ssub.s32 %s21, 2
      %s34 = sadd.s32 1, %s29
      %p35 = scmp.ge.s32.totalorder %s34, 4
      %s36 = scalar_select %p35, 0, %s34
      %s37 = sadd.s32 1, %s28
      %s38 = scalar_select %p35, %s37, %s28
      %p39 = scmp.ge.s32.totalorder %s38, 1
      %s40 = scalar_select %p39, 0, %s38
      %s41 = sld [smem:[#allocation4 + %s29]]
      %s42 = sld [smem:[#allocation4 + %s36]]
      %s43 = ssub.s32 %s41, %s42
      %s44 = ssub.s32 %s28, %s40
      %s45 = sor.u32 %s43, %s44
      %p46 = scmp.eq.s32.totalorder %s45, 0
      %s48 = sadd.s32 %s47, 1
      %s49 = scalar_select %p46, %s47, %s48
      %p52 = pneg %p46
      %p53 = scmp.eq.s32.totalorder %s21, 3
      %p54 = por %p52, %p53
      %p55 = scmp.ne.s32.totalorder %s47, %s50
      %p56 = scmp.eq.s32.totalorder %s21, 0
      %p57 = por %p55, %p56
      %p58 = scmp.ne.s32.totalorder %s47, %s50
      %p59 = scmp.eq.s32.totalorder %s26, 3
      %p60 = por %p58, %p59
      %p61 = scmp.ne.s32.totalorder %s50, %s51
      %p62 = scmp.eq.s32.totalorder %s26, 0
      %p63 = por %p61, %p62
      %p64 = scmp.ne.s32.totalorder %s50, %s51
      %p65 = scmp.eq.s32.totalorder %s27, 3
      %p66 = por %p64, %p65
      %p68 = scmp.ne.s32.totalorder %s51, %s67
      %p69 = scmp.eq.s32.totalorder %s27, 0
      %p70 = por %p68, %p69
      %s71 = ssub.s32 %s28, %s40
      %p72 = scmp.eq.s32.totalorder %s71, 0
      %s74 = sadd.s32 %s73, 1
      %s75 = scalar_select %p72, %s73, %s74
      %p78 = pneg %p72
      %p79 = scmp.eq.s32.totalorder %s21, 3
      %p80 = por %p78, %p79
      %p81 = scmp.ne.s32.totalorder %s73, %s76
      %p82 = scmp.eq.s32.totalorder %s21, 0
      %p83 = por %p81, %p82
      %p84 = scmp.ne.s32.totalorder %s73, %s76
      %p85 = scmp.eq.s32.totalorder %s26, 3
      %p86 = por %p84, %p85
      %p87 = scmp.ne.s32.totalorder %s76, %s77
      %p88 = scmp.eq.s32.totalorder %s26, 0
      %p89 = por %p87, %p88
      %p90 = scmp.ne.s32.totalorder %s76, %s77
      %p91 = scmp.eq.s32.totalorder %s27, 3
      %p92 = por %p90, %p91
      %p94 = scmp.ne.s32.totalorder %s77, %s93
      %p95 = scmp.eq.s32.totalorder %s27, 0
      %p96 = por %p94, %p95
      %p97 = scmp.le.s32.totalorder 1, %s21
      %p98 = scmp.lt.s32.totalorder %s21, 5
      %p99 = pnand %p97, %p98
      %p100 = pneg %p99
      // Predicated region
      $region9: #{tpu_custom_call.1} parent=5 // pred_check
        _
      $region10: #{tpu_custom_call.1} parent=5 // pred_check_branch
        %102 = sbr.rel (%p99) target = $region12
      $region11: #{tpu_custom_call.1} parent=5 // pred_region
        %s103 = ssub.s32 %s21, 1
      $region12: #{tpu_custom_call.1} parent=5 // pred_fallthru
        _
      %p104 = scmp.lt.s32.totalorder %s21, 4
      // Predicated region
      $region13: #{tpu_custom_call.1} parent=5 // pred_check
        %p105 = pneg %p104
      $region14: #{tpu_custom_call.1} parent=5 // pred_check_branch
        %107 = sbr.rel (%p105) target = $region16
      $region15: #{tpu_custom_call.1} parent=5 // pred_region
        // Predicated region
        $region17: #{tpu_custom_call.1} parent=15 // pred_check
          %p108 = pneg %p57
        $region18: #{tpu_custom_call.1} parent=15 // pred_check_branch
          %110 = sbr.rel (%p108) target = $region20
        $region19: #{tpu_custom_call.1} parent=15 // pred_region
          %s111 = sand.u32 %s47, 1
          %s112 = scalar_lea.sflag [#allocation7], %s111
          %s113 = sand.u32 %s47, 1
          %s114 = smul.addr %s113, 16
          %s115 = scalar_lea.vmem [#allocation6], %s114
          %s116 = sld [smem:[#allocation4 + %s29]]
          %s117 = smul.u32 2, %s28
          %s119 = ssub.s32 256, 256
          %120 = vsyncadd %s112, %s119
          %s121 = smul.addr %s116, 2
          %s122 = sadd.s32 %s117, %s121
          %s123 = smul.addr %s122, 128
          %s124 = scalar_lea.hbm %s2, %s123
          %s125 = sshll.u32 %s115, 4
          %s126 = int_to_ptr.vmem [resolvable:$true] %s125
          %131 = dma.hbm_to_vmem [thread:$0]  %s124, 256, %s126, %s112, 128, 128, 8
        $region20: #{tpu_custom_call.1} parent=15 // pred_fallthru
          _
      $region16: #{tpu_custom_call.1} parent=5 // pred_fallthru
        _
      %p132 = scmp.le.s32.totalorder 1, %s21
      %p133 = scmp.lt.s32.totalorder %s21, 5
      %p134 = pnand %p132, %p133
      %p135 = pneg %p134
      // Predicated region
      $region21: #{tpu_custom_call.1} parent=5 // pred_check
        _
      $region22: #{tpu_custom_call.1} parent=5 // pred_check_branch
        %137 = sbr.rel (%p134) target = $region24
      $region23: #{tpu_custom_call.1} parent=5 // pred_region
        %s138 = ssub.s32 %s21, 1
        %s139 = sand.u32 %s50, 1
        %s140 = scalar_lea.sflag [#allocation7], %s139
        %s141 = sand.u32 %s50, 1
        %s142 = smul.addr %s141, 16
        %s143 = scalar_lea.vmem [#allocation6], %s142
        // Predicated region
        $region25: #{tpu_custom_call.1} parent=23 // pred_check
          %p144 = pneg %p63
        $region26: #{tpu_custom_call.1} parent=23 // pred_check_branch
          %146 = sbr.rel (%p144) target = $region28
        $region27: #{tpu_custom_call.1} parent=23 // pred_region
          %147 = dma.done %s140, 256
        $region28: #{tpu_custom_call.1} parent=23 // pred_fallthru
          _
        %s148 = sand.u32 %s50, 1
        %s149 = scalar_lea.sflag [#allocation7], %s148
        %s150 = sand.u32 %s50, 1
        %s151 = smul.addr %s150, 16
        %s152 = scalar_lea.vmem [#allocation6], %s151
        %p153 = pneg %p63
        %p154 = pneg %p60
        %p155 = pneg %p89
        %p156 = pneg %p86
        %s157 = sld [smem:[#allocation4 + %s31]]
        %s158 = smul.u32 2, %s30
        %s159 = smul.u32 2, %s30
        %p160 = scmp.eq.s32.totalorder %s31, 0
        // Predicated region
        $region29: #{tpu_custom_call.1} parent=23 // pred_check
          %p161 = pneg %p160
        $region30: #{tpu_custom_call.1} parent=23 // pred_check_branch
          %163 = sbr.rel (%p161) target = $region32
        $region31: #{tpu_custom_call.1} parent=23 // pred_region
          %164 = vst [vmem:[#allocation2] sm:$0xff] 0.0
          %165 = vst [vmem:[#allocation2 + $0x8] sm:$0xff] 0.0
        $region32: #{tpu_custom_call.1} parent=23 // pred_fallthru
          _
        %v166 = vld [vmem:[#allocation2] sm:$0xff]
        %v167 = vld [vmem:[#allocation2 + $0x8] sm:$0xff]
        %s168 = sld [smem:[#allocation5 + %s31]]
        %v169 = vld [vmem:[%s143] sm:$0xff]
        %v170 = vld [vmem:[%s143 + $0x8] sm:$0xff]
        %v171 = vstv %s168
        %v172 = vmul.f32 %v171, %v169
        %v173 = vmul.f32 %v171, %v170
        %v174 = vadd.f32 %v166, %v172
        %v175 = vadd.f32 %v167, %v173
        %176 = vst [vmem:[#allocation2] sm:$0xff] %v174
        %177 = vst [vmem:[#allocation2 + $0x8] sm:$0xff] %v175
        %p178 = scmp.eq.s32.totalorder %s31, 3
        // Predicated region
        $region33: #{tpu_custom_call.1} parent=23 // pred_check
          %p179 = pneg %p178
        $region34: #{tpu_custom_call.1} parent=23 // pred_check_branch
          %181 = sbr.rel (%p179) target = $region36
        $region35: #{tpu_custom_call.1} parent=23 // pred_region
          %v182 = vld [vmem:[#allocation2] sm:$0xff]
          %v183 = vld [vmem:[#allocation2 + $0x8] sm:$0xff]
          %184 = vst [vmem:[#allocation9] sm:$0xff] %v182
          %185 = vst [vmem:[#allocation9 + $0x8] sm:$0xff] %v183
        $region36: #{tpu_custom_call.1} parent=23 // pred_fallthru
          _
        // Predicated region
        $region37: #{tpu_custom_call.1} parent=23 // pred_check
          %p186 = pneg %p86
        $region38: #{tpu_custom_call.1} parent=23 // pred_check_branch
          %188 = sbr.rel (%p186) target = $region40
        $region39: #{tpu_custom_call.1} parent=23 // pred_region
          %s189 = smul.u32 2, %s30
          %s191 = ssub.s32 256, 256
          %192 = vsyncadd [#allocation8], %s191
          %s193 = smul.addr %s189, 128
          %s194 = scalar_lea.hbm %s3, %s193
          %s195 = sshll.u32 [#allocation9], 4
          %s196 = int_to_ptr.vmem [resolvable:$true] %s195
          %201 = dma.vmem_to_hbm [thread:$0]  %s196, 256, %s194, [#allocation8], 128, 128, 8
        $region40: #{tpu_custom_call.1} parent=23 // pred_fallthru
          _
        // Predicated region
        $region41: #{tpu_custom_call.1} parent=23 // pred_check
          %p202 = pneg %p86
        $region42: #{tpu_custom_call.1} parent=23 // pred_check_branch
          %204 = sbr.rel (%p202) target = $region44
        $region43: #{tpu_custom_call.1} parent=23 // pred_region
          %205 = dma.done [#allocation8], 256
        $region44: #{tpu_custom_call.1} parent=23 // pred_fallthru
          _
      $region24: #{tpu_custom_call.1} parent=5 // pred_fallthru
        _
      %p206 = scmp.le.s32.totalorder 2, %s21
      // Predicated region
      $region45: #{tpu_custom_call.1} parent=5 // pred_check
        %p207 = pneg %p206
      $region46: #{tpu_custom_call.1} parent=5 // pred_check_branch
        %209 = sbr.rel (%p207) target = $region48
      $region47: #{tpu_custom_call.1} parent=5 // pred_region
        %s210 = ssub.s32 %s21, 2
      $region48: #{tpu_custom_call.1} parent=5 // pred_fallthru
        _
    $region6: #{tpu_custom_call.1} parent=1 // loop_footer
      %s25 = sadd.s32 1, %s21
    $region7: #{tpu_custom_call.1} parent=1 // loop_footer_branch
      %20 = sbr.rel target = $region3
    $region8: #{tpu_custom_call.1} parent=1 // loop_exit
      _
    %211 = vsyncpa [#allocation7], 1
    %s212 = scalar_lea.sflag [#allocation7], 1
    %213 = vsyncpa %s212, 1
    %214 = vsyncpa [#allocation8], 1
    %s215 = scalar_lea.sflag [#allocation8], 1
    %216 = vsyncpa %s215, 1

</llo_original>
